<compile_context>
chip_gen: v7x
topology: tpu7x:2x2x1
jax: 0.10.0
libtpu: 0.0.40
codegen_flags: <defaults>
</compile_context>

<pallas_src>
import functools

import jax
import jax.numpy as jnp
from jax.experimental import pallas as pl
from jax.experimental.pallas import tpu as pltpu

# Large finite negative sentinel for padded logits: (1-0)*x + softplus(-x)
# cancels to exactly 0 (must NOT be -inf, which would give inf - inf = NaN).
_PAD_LOGIT = -1.0e4


def _round_up(x, m):
    return (x + m - 1) // m * m


def _vmem_capacity_bytes():
    """Physical VMEM per core; fall back to the smallest (v7x, 64 MiB)."""
    try:
        return int(pltpu.get_tpu_info().vmem_capacity_bytes)
    except Exception:
        return 64 * 1024 * 1024


def _num_tensorcores():
    """2 TensorCores/chip on v7x, 1 on v5e/v6e. Tiling hint only."""
    try:
        kind = jax.devices()[0].device_kind.lower()
        if "v7" in kind:
            return 2
    except Exception:
        pass
    return 1


def _bce_log_loss_kernel(x_ref, t_ref, out_ref, s_acc, a_acc, b_acc, *, n_real):
    """One (tn, tc) tile: accumulate per-column s, A, B; finalize on last N step."""
    ni = pl.program_id(1)          # batch-block index (reduction axis, innermost)

    @pl.when(ni == 0)
    def _init():
        s_acc[...] = jnp.zeros_like(s_acc)
        a_acc[...] = jnp.zeros_like(a_acc)
        b_acc[...] = jnp.zeros_like(b_acc)

    x = x_ref[...].astype(jnp.float32)              # logits  (tn, tc)
    t = jnp.abs(t_ref[...].astype(jnp.float32))     # targets (tn, tc), torch.abs

    # softplus(-x) = log(1 + exp(-|x|)) + max(-x, 0)   (numerically stable).
    # Padded elements (x = -1e4, t = 0) contribute exactly 0 to all three sums.
    softplus = jnp.log1p(jnp.exp(-jnp.abs(x))) + jnp.maximum(-x, 0.0)
    a_el = (1.0 - t) * x + softplus     # unweighted BCE-with-logits term
    b_el = t * softplus                 # pos_weight-scaled term

    s_acc[...] += jnp.sum(t, axis=0, keepdims=True)
    a_acc[...] += jnp.sum(a_el, axis=0, keepdims=True)
    b_acc[...] += jnp.sum(b_el, axis=0, keepdims=True)

    @pl.when(ni == pl.num_programs(1) - 1)
    def _finalize():
        s = s_acc[...]
        safe_s = jnp.where(s == 0.0, 1.0, s)
        # pos_weight w_c = (N - s_c) / s_c; the module defines w_c = 0 when
        # s_c == 0 (literal PyTorch pos_weight would give inf/NaN there).
        w = jnp.where(s == 0.0, 0.0, (jnp.float32(n_real) - s) / safe_s)
        # Per-column total loss = A_c + (w_c - 1) * B_c  (lane-dense (1, tc) store).
        out_ref[...] = a_acc[...] + (w - 1.0) * b_acc[...]


def bce_log_loss(output, target, *, tn=None, tc=None):
    """Pallas TPU implementation of BCELogLoss.forward (smooth=False).

    Accepts f32 or bf16 logits/targets of shape (N, C); returns the scalar mean
    BCE-with-logits loss with per-class pos_weight = (N - sum_c) / sum_c
    (0 for classes with no positives).  `tn`/`tc` override auto tile sizing
    (used by tests to force the multi-tile path).
    """
    assert output.ndim == 2 and output.shape == target.shape
    n, c = output.shape

    out_isz = jnp.dtype(output.dtype).itemsize
    tgt_isz = jnp.dtype(target.dtype).itemsize
    max_isz = max(out_isz, tgt_isz)
    min_isz = min(out_isz, tgt_isz)
    # Sublane alignment: 8 rows for 4-byte dtypes, 16 for 2-byte (bf16/f16).
    sublane = max(8, 32 // max(min_isz, 1))

    vmem_cap = _vmem_capacity_bytes()
    # Per-input, per-buffer tile byte budget (byte-based, so bf16 gets 2x rows):
    # big tiles on 128-MiB chips (v5e/v6e); re-derived for v7x's 64-MiB VMEM so
    # the 2-inputs x 2-buffers pipelined footprint stays <= ~32-40 MiB.
    tile_budget = (8 << 20) if vmem_cap >= (100 << 20) else (4 << 20)

    c_pad128 = _round_up(c, 128)
    if tc is None:
        # Lane-dense default: full (padded) class axis per tile -> fully
        # contiguous (tn, C) HBM slabs and an effectively 1-D grid ...
        tc_cap = max(128, (tile_budget // (sublane * max_isz)) // 128 * 128)
        tc_blk = min(c_pad128, tc_cap)
        # ... except on 2-TensorCore chips (v7x): keep >= 2 C blocks so the
        # "parallel" axis feeds both cores (~2x for small-C workloads).
        if _num_tensorcores() >= 2 and c_pad128 >= 256 and tc_blk >= c_pad128:
            tc_blk = max(128, _round_up(-(-c_pad128 // 2), 128))
    else:
        tc_blk = min(_round_up(tc, 128), c_pad128)

    if tn is None:
        tn_cap = max(sublane,
                     (tile_budget // (tc_blk * max_isz)) // sublane * sublane)
        tn_blk = min(tn_cap, _round_up(n, sublane))
    else:
        tn_blk = min(_round_up(tn, sublane), _round_up(n, sublane))

    n_pad = _round_up(n, tn_blk)
    c_pad = _round_up(c, tc_blk)

    if (n_pad, c_pad) != (n, c):
        # Sentinel padding instead of per-tile masking: logits -> -1e4 (finite),
        # targets -> 0; padded elements then contribute exactly 0 to s/A/B and
        # padded columns produce a 0 in the per-column output slab.
        output = jnp.pad(output, ((0, n_pad - n), (0, c_pad - c)),
                         constant_values=_PAD_LOGIT)
        target = jnp.pad(target, ((0, n_pad - n), (0, c_pad - c)))

    grid = (c_pad // tc_blk, n_pad // tn_blk)   # (parallel C, reduction N last)

    # VMEM budget: 2 inputs x 2 pipeline buffers x tile + accumulator scratch.
    footprint = 2 * tn_blk * tc_blk * (out_isz + tgt_isz) + 4 * tc_blk * 4
    vmem_limit = int(min(max(32 << 20, 2 * footprint + (8 << 20)),
                         (3 * vmem_cap) // 4))

    kernel = functools.partial(_bce_log_loss_kernel, n_real=n)

    per_col = pl.pallas_call(
        kernel,
        out_shape=jax.ShapeDtypeStruct((1, c_pad), jnp.float32),
        grid_spec=pltpu.PrefetchScalarGridSpec(
            num_scalar_prefetch=0,
            grid=grid,
            in_specs=[
                pl.BlockSpec((tn_blk, tc_blk), lambda ci, ni: (ni, ci)),
                pl.BlockSpec((tn_blk, tc_blk), lambda ci, ni: (ni, ci)),
            ],
            out_specs=pl.BlockSpec((1, tc_blk), lambda ci, ni: (0, ci)),
            scratch_shapes=[
                pltpu.VMEM((1, tc_blk), jnp.float32),   # s_acc: per-column sum(t)
                pltpu.VMEM((1, tc_blk), jnp.float32),   # a_acc
                pltpu.VMEM((1, tc_blk), jnp.float32),   # b_acc
            ],
        ),
        compiler_params=pltpu.CompilerParams(
            # C blocks independent -> megacore sharding on v7x; N is the
            # accumulator axis and must stay "arbitrary".
            dimension_semantics=("parallel", "arbitrary"),
            vmem_limit_bytes=vmem_limit,
        ),
    )(output, target)

    # Finish the mean with a single scalar multiply (1/(N*C)) outside the kernel.
    return jnp.sum(per_col) * (1.0 / (n * c))


def _reference(output, target):
    """Pure-JAX reference (same math as PyTorch BCEWithLogits + pos_weight)."""
    x = output.astype(jnp.float32)
    t = jnp.abs(target.astype(jnp.float32))
    n = x.shape[0]
    s = jnp.sum(t, axis=0)
    w = jnp.where(s == 0.0, 0.0, (n - s) / jnp.where(s == 0.0, 1.0, s))
    sp = jnp.log1p(jnp.exp(-jnp.abs(x))) + jnp.maximum(-x, 0.0)
    lw = 1.0 + (w[None, :] - 1.0) * t
    return jnp.mean((1.0 - t) * x + lw * sp)


if __name__ == "__main__":
    key = jax.random.PRNGKey(0)

    # --- Test 1: tiny (N, C) matching the module's typical usage, f32, auto tiles.
    k1, k2, k3, key = jax.random.split(key, 4)
    N, C = 8, 4
    output = jax.random.normal(k1, (N, C), dtype=jnp.float32)
    labels = (jax.random.uniform(k2, (N, C)) > 0.5).astype(jnp.float32)
    signs = jnp.where(jax.random.uniform(k3, (N, C)) > 0.5, 1.0, -1.0)
    target = labels * signs                      # values in {-1, 0, 1} -> exercises abs()

    loss = bce_log_loss(output, target)
    jax.block_until_ready(loss)
    ref = _reference(output, target)
    assert jnp.allclose(loss, ref, rtol=1e-5, atol=1e-5), (loss, ref)

    # --- Test 2: unaligned shape with forced small tiles to exercise the full
    # tiled path: grid = (3, 3), sentinel padding in both N and C, multi-step
    # N-axis accumulation.
    k1, k2, k3, key = jax.random.split(key, 4)
    N2, C2 = 20, 300
    output2 = jax.random.normal(k1, (N2, C2), dtype=jnp.float32)
    labels2 = (jax.random.uniform(k2, (N2, C2)) > 0.7).astype(jnp.float32)
    signs2 = jnp.where(jax.random.uniform(k3, (N2, C2)) > 0.5, 1.0, -1.0)
    target2 = labels2 * signs2
    loss2 = bce_log_loss(output2, target2, tn=8, tc=128)
    jax.block_until_ready(loss2)
    ref2 = _reference(output2, target2)
    assert jnp.allclose(loss2, ref2, rtol=1e-4, atol=1e-4), (loss2, ref2)

    # --- Test 2b: same data through the auto-tiled path (lane-dense tc).
    loss2b = bce_log_loss(output2, target2)
    jax.block_until_ready(loss2b)
    assert jnp.allclose(loss2b, ref2, rtol=1e-4, atol=1e-4), (loss2b, ref2)

    # --- Test 3: bf16 inputs (halved HBM traffic; kernel upcasts to f32).
    loss3 = bce_log_loss(output.astype(jnp.bfloat16), target.astype(jnp.bfloat16))
    jax.block_until_ready(loss3)
    ref3 = _reference(output.astype(jnp.bfloat16), target.astype(jnp.bfloat16))
    assert jnp.allclose(loss3, ref3, rtol=1e-3, atol=1e-3), (loss3, ref3)

    print("KERNEL_OK")
</pallas_src>

<mosaic_0001>
module attributes {stable_mosaic.version = 11 : i64} {
  func.func @_bce_log_loss_kernel(%arg0: i32, %arg1: i32, %arg2: memref<8x128xf32, #tpu.memory_space<vmem>>, %arg3: memref<8x128xf32, #tpu.memory_space<vmem>>, %arg4: memref<1x128xf32, #tpu.memory_space<vmem>>, %arg5: memref<1x128xf32, #tpu.memory_space<vmem>>, %arg6: memref<1x128xf32, #tpu.memory_space<vmem>>, %arg7: memref<1x128xf32, #tpu.memory_space<vmem>>) attributes {dimension_semantics = [#tpu.dimension_semantics<parallel>, #tpu.dimension_semantics<arbitrary>], iteration_bounds = array<i64: 1, 1>, scalar_prefetch = 0 : i64, scratch_operands = 3 : i64, tpu.core_type = #tpu.core_type<tc>, window_params = [{transform_indices = @transform_0, window_bounds = array<i64: 8, 128>}, {transform_indices = @transform_1, window_bounds = array<i64: 8, 128>}, {transform_indices = @transform_2, window_bounds = array<i64: 1, 128>}]} {
    %c0_i32 = arith.constant 0 : i32
    %0 = arith.cmpi eq, %arg1, %c0_i32 : i32
    %1 = arith.extui %0 : i1 to i32
    %c0_i32_0 = arith.constant 0 : i32
    %2 = arith.cmpi ne, %1, %c0_i32_0 : i32
    scf.if %2 {
      %cst_24 = arith.constant 0.000000e+00 : f32
      %39 = vector.broadcast %cst_24 : f32 to vector<1x128xf32>
      %c0_25 = arith.constant 0 : index
      %c0_26 = arith.constant 0 : index
      %40 = vector.load %arg5[%c0_25, %c0_26] : memref<1x128xf32, #tpu.memory_space<vmem>>, vector<1x128xf32>
      tpu.vector_store %arg5[%c0_25, %c0_26], %39 {strides = array<i32>} : memref<1x128xf32, #tpu.memory_space<vmem>>, vector<1x128xf32>,
      %cst_27 = arith.constant 0.000000e+00 : f32
      %41 = vector.broadcast %cst_27 : f32 to vector<1x128xf32>
      %c0_28 = arith.constant 0 : index
      %c0_29 = arith.constant 0 : index
      %42 = vector.load %arg6[%c0_28, %c0_29] : memref<1x128xf32, #tpu.memory_space<vmem>>, vector<1x128xf32>
      tpu.vector_store %arg6[%c0_28, %c0_29], %41 {strides = array<i32>} : memref<1x128xf32, #tpu.memory_space<vmem>>, vector<1x128xf32>,
      %cst_30 = arith.constant 0.000000e+00 : f32
      %43 = vector.broadcast %cst_30 : f32 to vector<1x128xf32>
      %c0_31 = arith.constant 0 : index
      %c0_32 = arith.constant 0 : index
      %44 = vector.load %arg7[%c0_31, %c0_32] : memref<1x128xf32, #tpu.memory_space<vmem>>, vector<1x128xf32>
      tpu.vector_store %arg7[%c0_31, %c0_32], %43 {strides = array<i32>} : memref<1x128xf32, #tpu.memory_space<vmem>>, vector<1x128xf32>,
    } else {
    }
    %c0 = arith.constant 0 : index
    %c0_1 = arith.constant 0 : index
    %3 = vector.load %arg2[%c0, %c0_1] : memref<8x128xf32, #tpu.memory_space<vmem>>, vector<8x128xf32>
    %c0_2 = arith.constant 0 : index
    %c0_3 = arith.constant 0 : index
    %4 = vector.load %arg3[%c0_2, %c0_3] : memref<8x128xf32, #tpu.memory_space<vmem>>, vector<8x128xf32>
    %5 = math.absf %4 : vector<8x128xf32>
    %6 = math.absf %3 : vector<8x128xf32>
    %cst = arith.constant 0.000000e+00 : f32
    %7 = vector.broadcast %cst : f32 to vector<8x128xf32>
    %8 = arith.subf %7, %6 : vector<8x128xf32>
    %9 = math.exp %8 : vector<8x128xf32>
    %10 = math.log1p %9 : vector<8x128xf32>
    %cst_4 = arith.constant 0.000000e+00 : f32
    %11 = vector.broadcast %cst_4 : f32 to vector<8x128xf32>
    %12 = arith.subf %11, %3 : vector<8x128xf32>
    %cst_5 = arith.constant 0.000000e+00 : f32
    %13 = vector.broadcast %cst_5 : f32 to vector<8x128xf32>
    %14 = arith.maximumf %12, %13 : vector<8x128xf32>
    %15 = arith.addf %10, %14 : vector<8x128xf32>
    %cst_6 = arith.constant 1.000000e+00 : f32
    %16 = vector.broadcast %cst_6 : f32 to vector<8x128xf32>
    %17 = arith.subf %16, %5 : vector<8x128xf32>
    %18 = arith.mulf %17, %3 : vector<8x128xf32>
    %19 = arith.addf %18, %15 : vector<8x128xf32>
    %20 = arith.mulf %5, %15 : vector<8x128xf32>
    %c0_7 = arith.constant 0 : index
    %c0_8 = arith.constant 0 : index
    %21 = vector.load %arg5[%c0_7, %c0_8] : memref<1x128xf32, #tpu.memory_space<vmem>>, vector<1x128xf32>
    %cst_9 = arith.constant dense<0.000000e+00> : vector<128xf32>
    %22 = vector.multi_reduction <add>, %5, %cst_9 [0] : vector<8x128xf32> to vector<128xf32>
    %23 = vector.shape_cast %22 : vector<128xf32> to vector<1x128xf32>
    %24 = arith.addf %21, %23 : vector<1x128xf32>
    %c0_10 = arith.constant 0 : index
    %c0_11 = arith.constant 0 : index
    %25 = vector.load %arg5[%c0_10, %c0_11] : memref<1x128xf32, #tpu.memory_space<vmem>>, vector<1x128xf32>
    tpu.vector_store %arg5[%c0_10, %c0_11], %24 {strides = array<i32>} : memref<1x128xf32, #tpu.memory_space<vmem>>, vector<1x128xf32>,
    %c0_12 = arith.constant 0 : index
    %c0_13 = arith.constant 0 : index
    %26 = vector.load %arg6[%c0_12, %c0_13] : memref<1x128xf32, #tpu.memory_space<vmem>>, vector<1x128xf32>
    %cst_14 = arith.constant dense<0.000000e+00> : vector<128xf32>
    %27 = vector.multi_reduction <add>, %19, %cst_14 [0] : vector<8x128xf32> to vector<128xf32>
    %28 = vector.shape_cast %27 : vector<128xf32> to vector<1x128xf32>
    %29 = arith.addf %26, %28 : vector<1x128xf32>
    %c0_15 = arith.constant 0 : index
    %c0_16 = arith.constant 0 : index
    %30 = vector.load %arg6[%c0_15, %c0_16] : memref<1x128xf32, #tpu.memory_space<vmem>>, vector<1x128xf32>
    tpu.vector_store %arg6[%c0_15, %c0_16], %29 {strides = array<i32>} : memref<1x128xf32, #tpu.memory_space<vmem>>, vector<1x128xf32>,
    %c0_17 = arith.constant 0 : index
    %c0_18 = arith.constant 0 : index
    %31 = vector.load %arg7[%c0_17, %c0_18] : memref<1x128xf32, #tpu.memory_space<vmem>>, vector<1x128xf32>
    %cst_19 = arith.constant dense<0.000000e+00> : vector<128xf32>
    %32 = vector.multi_reduction <add>, %20, %cst_19 [0] : vector<8x128xf32> to vector<128xf32>
    %33 = vector.shape_cast %32 : vector<128xf32> to vector<1x128xf32>
    %34 = arith.addf %31, %33 : vector<1x128xf32>
    %c0_20 = arith.constant 0 : index
    %c0_21 = arith.constant 0 : index
    %35 = vector.load %arg7[%c0_20, %c0_21] : memref<1x128xf32, #tpu.memory_space<vmem>>, vector<1x128xf32>
    tpu.vector_store %arg7[%c0_20, %c0_21], %34 {strides = array<i32>} : memref<1x128xf32, #tpu.memory_space<vmem>>, vector<1x128xf32>,
    %c0_i32_22 = arith.constant 0 : i32
    %36 = arith.cmpi eq, %arg1, %c0_i32_22 : i32
    %37 = arith.extui %36 : i1 to i32
    %c0_i32_23 = arith.constant 0 : i32
    %38 = arith.cmpi ne, %37, %c0_i32_23 : i32
    scf.if %38 {
      %c0_24 = arith.constant 0 : index
      %c0_25 = arith.constant 0 : index
      %39 = vector.load %arg5[%c0_24, %c0_25] : memref<1x128xf32, #tpu.memory_space<vmem>>, vector<1x128xf32>
      %cst_26 = arith.constant 0.000000e+00 : f32
      %40 = vector.broadcast %cst_26 : f32 to vector<1x128xf32>
      %41 = arith.cmpf oeq, %39, %40 : vector<1x128xf32>
      %cst_27 = arith.constant 1.000000e+00 : f32
      %42 = vector.broadcast %cst_27 : f32 to vector<1x128xf32>
      %43 = arith.select %41, %42, %39 : vector<1x128xi1>, vector<1x128xf32>
      %cst_28 = arith.constant 0.000000e+00 : f32
      %44 = vector.broadcast %cst_28 : f32 to vector<1x128xf32>
      %45 = arith.cmpf oeq, %39, %44 : vector<1x128xf32>
      %cst_29 = arith.constant 8.000000e+00 : f32
      %46 = vector.broadcast %cst_29 : f32 to vector<1x128xf32>
      %47 = arith.subf %46, %39 : vector<1x128xf32>
      %48 = arith.divf %47, %43 : vector<1x128xf32>
      %cst_30 = arith.constant 0.000000e+00 : f32
      %49 = vector.broadcast %cst_30 : f32 to vector<1x128xf32>
      %50 = arith.select %45, %49, %48 : vector<1x128xi1>, vector<1x128xf32>
      %c0_31 = arith.constant 0 : index
      %c0_32 = arith.constant 0 : index
      %51 = vector.load %arg6[%c0_31, %c0_32] : memref<1x128xf32, #tpu.memory_space<vmem>>, vector<1x128xf32>
      %cst_33 = arith.constant 1.000000e+00 : f32
      %52 = vector.broadcast %cst_33 : f32 to vector<1x128xf32>
      %53 = arith.subf %50, %52 : vector<1x128xf32>
      %c0_34 = arith.constant 0 : index
      %c0_35 = arith.constant 0 : index
      %54 = vector.load %arg7[%c0_34, %c0_35] : memref<1x128xf32, #tpu.memory_space<vmem>>, vector<1x128xf32>
      %55 = arith.mulf %53, %54 : vector<1x128xf32>
      %56 = arith.addf %51, %55 : vector<1x128xf32>
      %c0_36 = arith.constant 0 : index
      %c0_37 = arith.constant 0 : index
      %57 = vector.load %arg4[%c0_36, %c0_37] : memref<1x128xf32, #tpu.memory_space<vmem>>, vector<1x128xf32>
      tpu.vector_store %arg4[%c0_36, %c0_37], %56 {strides = array<i32>} : memref<1x128xf32, #tpu.memory_space<vmem>>, vector<1x128xf32>,
    } else {
    }
    return
  }
  func.func @transform_0(%arg0: i32, %arg1: i32) -> (i32, i32) {
    %c0_i32 = arith.constant 0 : i32
    return %arg1, %arg0 : i32, i32
  }
  func.func @transform_1(%arg0: i32, %arg1: i32) -> (i32, i32) {
    %c0_i32 = arith.constant 0 : i32
    return %arg1, %arg0 : i32, i32
  }
  func.func @transform_2(%arg0: i32, %arg1: i32) -> (i32, i32) {
    %c0_i32 = arith.constant 0 : i32
    %c0_i32_0 = arith.constant 0 : i32
    return %c0_i32, %arg0 : i32, i32
  }
}

</mosaic_0001>

<llo_original>
// kernel: tpu_custom_call.1
$region0: #{tpu_custom_call.1}
  #allocation0 [shape = 'u32[]', space=smem, size = 0x4, offset = 0x4, fixed_abs, tag = 'smem constant byte address 0x4 - core index']
  #allocation1 [shape = 'u32[144,128]{1,0:T(1,128)}', space=vmem, size = 0x12000, scoped, tag = 'internal scratch']
  #allocation2 [shape = 'f32[1,128]{1,0:T(1,128)}', space=vmem, size = 0x200, scoped, tag = 'scratch operand']
  #allocation3 [shape = 'f32[1,128]{1,0:T(1,128)}', space=vmem, size = 0x200, scoped, tag = 'scratch operand']
  #allocation4 [shape = 'f32[1,128]{1,0:T(1,128)}', space=vmem, size = 0x200, scoped, tag = 'scratch operand']
  %s0 = inlined_call_operand.hbm [shape: f32[8,128], index: 0, kind: input, shape index: {}]
  %s1 = inlined_call_operand.hbm [shape: f32[8,128], index: 1, kind: input, shape index: {}]
  %s2 = inlined_call_operand.hbm [shape: f32[1,128], index: 2, kind: output, shape index: {}]
  %s3 = sld [smem:[#allocation0]]
  $region34: #{tpu_custom_call.1} parent=0
    _
  %s5 = ssub.s32 1, %s3
  %s6 = scalar_select 0, %s5, %s3
  $region1: #{tpu_custom_call.1} parent=0
    #allocation5 [shape = 'u8[4096]{0}', space=vmem, size = 0x1000, scoped, tag = 'input window, operand 0, single buffered']
    #allocation6 [shape = 's32[1]{0}', space=sflag, size = 0x4, scoped, tag = 'scoped memory for tpu_custom_call.1']
    #allocation7 [shape = 's32[1]{0}', space=sflag, size = 0x4, scoped, tag = 'scoped memory for tpu_custom_call.1']
    #allocation8 [shape = 'u8[4096]{0}', space=vmem, size = 0x1000, scoped, tag = 'input window, operand 1, single buffered']
    #allocation9 [shape = 's32[1]{0}', space=sflag, size = 0x4, scoped, tag = 'scoped memory for tpu_custom_call.1']
    #allocation10 [shape = 'u8[512]{0}', space=vmem, size = 0x400, scoped, tag = 'output window, operand 0, single buffered']
    %7 = vsyncpa [#allocation6], 0
    %8 = vsyncpa [#allocation9], 0
    %9 = vsyncpa [#allocation7], 0
    // Predicated region
    $region2: #{tpu_custom_call.1} parent=1 // pred_check
      _
    $region3: #{tpu_custom_call.1} parent=1 // pred_check_branch
      %11 = sbr.rel (0) target = $region5
    $region4: #{tpu_custom_call.1} parent=1 // pred_region
      %s13 = ssub.s32 128, 128
      %14 = vsyncadd [#allocation6], %s13
      %s16 = sshll.u32 [#allocation5], 4
      %s17 = int_to_ptr.vmem [resolvable:$true] %s16
      %19 = dma.hbm_to_vmem [thread:$0]  %s0, 128, %s17, [#allocation6]
    $region5: #{tpu_custom_call.1} parent=1 // pred_fallthru
      _
    // Predicated region
    $region6: #{tpu_custom_call.1} parent=1 // pred_check
      _
    $region7: #{tpu_custom_call.1} parent=1 // pred_check_branch
      %21 = sbr.rel (0) target = $region9
    $region8: #{tpu_custom_call.1} parent=1 // pred_region
      %s23 = ssub.s32 128, 128
      %24 = vsyncadd [#allocation9], %s23
      %s26 = sshll.u32 [#allocation8], 4
      %s27 = int_to_ptr.vmem [resolvable:$true] %s26
      %29 = dma.hbm_to_vmem [thread:$0]  %s1, 128, %s27, [#allocation9]
    $region9: #{tpu_custom_call.1} parent=1 // pred_fallthru
      _
    // Predicated region
    $region10: #{tpu_custom_call.1} parent=1 // pred_check
      _
    $region11: #{tpu_custom_call.1} parent=1 // pred_check_branch
      %31 = sbr.rel (0) target = $region13
    $region12: #{tpu_custom_call.1} parent=1 // pred_region
      %32 = dma.done [#allocation6], 128
    $region13: #{tpu_custom_call.1} parent=1 // pred_fallthru
      _
    // Predicated region
    $region14: #{tpu_custom_call.1} parent=1 // pred_check
      _
    $region15: #{tpu_custom_call.1} parent=1 // pred_check_branch
      %34 = sbr.rel (0) target = $region17
    $region16: #{tpu_custom_call.1} parent=1 // pred_region
      %35 = dma.done [#allocation9], 128
    $region17: #{tpu_custom_call.1} parent=1 // pred_fallthru
      _
    %p36 = scmp.eq.s32.totalorder 0, 0
    // Predicated region
    $region18: #{tpu_custom_call.1} parent=1 // pred_check
      %p37 = pneg %p36
    $region19: #{tpu_custom_call.1} parent=1 // pred_check_branch
      %39 = sbr.rel (%p37) target = $region21
    $region20: #{tpu_custom_call.1} parent=1 // pred_region
      %40 = vst [vmem:[#allocation2] sm:$0x1] 0.0
      %41 = vst [vmem:[#allocation3] sm:$0x1] 0.0
      %42 = vst [vmem:[#allocation4] sm:$0x1] 0.0
    $region21: #{tpu_custom_call.1} parent=1 // pred_fallthru
      _
    %v43 = vld [vmem:[#allocation5] sm:$0xff]
    %v44 = vld [vmem:[#allocation8] sm:$0xff]
    %v45 = vand.u32 2147483647, %v44
    %v46 = vand.u32 2147483647, %v43
    %v47 = vsub.f32 0.0, %v46
    %v48 = vmul.f32 %v47, 1.442695
    %v49 = vpow.pop %v48
    %v50 = vadd.f32 %v49, 1.0
    %v51 = vlog2.pop %v50
    %v52 = vmul.f32 %v51, 0.6931472
    %v53 = vmul.f32 -0.5, %v49
    %v54 = vadd.f32 %v53, 1.0
    %v55 = vmul.f32 %v54, %v49
    %v56 = vand.u32 2147483647, %v49
    %vm57 = vcmp.lt.f32.partialorder %v56, 0.0004427343
    %v58 = vsel %vm57, %v55, %v52
    %v59 = vsub.f32 0.0, %v43
    %v60 = vmax.f32 %v59, 0.0
    %v61 = vadd.f32 %v58, %v60
    %v62 = vsub.f32 1.0, %v45
    %v63 = vmul.f32 %v62, %v43
    %v64 = vadd.f32 %v63, %v61
    %v65 = vmul.f32 %v45, %v61
    %v66 = vld [vmem:[#allocation2] sm:$0x1]
    %v67 = vrot.slane %v45, 4
    %v68 = vadd.f32 %v45, %v67
    %v69 = vrot.slane %v68, 2
    %v70 = vadd.f32 %v68, %v69
    %v71 = vrot.slane %v70, 1
    %v72 = vadd.f32 %v70, %v71
    %v73 = vadd.f32 %v66, %v72
    %74 = vst [vmem:[#allocation2] sm:$0x1] %v73
    %v75 = vld [vmem:[#allocation3] sm:$0x1]
    %v76 = vrot.slane %v64, 4
    %v77 = vadd.f32 %v64, %v76
    %v78 = vrot.slane %v77, 2
    %v79 = vadd.f32 %v77, %v78
    %v80 = vrot.slane %v79, 1
    %v81 = vadd.f32 %v79, %v80
    %v82 = vadd.f32 %v75, %v81
    %83 = vst [vmem:[#allocation3] sm:$0x1] %v82
    %v84 = vld [vmem:[#allocation4] sm:$0x1]
    %v85 = vrot.slane %v65, 4
    %v86 = vadd.f32 %v65, %v85
    %v87 = vrot.slane %v86, 2
    %v88 = vadd.f32 %v86, %v87
    %v89 = vrot.slane %v88, 1
    %v90 = vadd.f32 %v88, %v89
    %v91 = vadd.f32 %v84, %v90
    %92 = vst [vmem:[#allocation4] sm:$0x1] %v91
    // Predicated region
    $region22: #{tpu_custom_call.1} parent=1 // pred_check
      %p93 = pneg %p36
    $region23: #{tpu_custom_call.1} parent=1 // pred_check_branch
      %95 = sbr.rel (%p93) target = $region25
    $region24: #{tpu_custom_call.1} parent=1 // pred_region
      %v96 = vld [vmem:[#allocation2] sm:$0x1]
      %vm97 = vcmp.eq.f32.partialorder %v96, 0.0
      %v98 = vsel %vm97, 1.0, %v96
      %v99 = vsub.f32 8.0, %v96
      %v100 = vrcp.pop %v98
      %v101 = vmul.f32 %v99, %v100
      %v102 = vsel %vm97, 0.0, %v101
      %v103 = vld [vmem:[#allocation3] sm:$0x1]
      %v104 = vsub.f32 %v102, 1.0
      %v105 = vld [vmem:[#allocation4] sm:$0x1]
      %v106 = vmul.f32 %v104, %v105
      %v107 = vadd.f32 %v103, %v106
      %108 = vst [vmem:[#allocation10] sm:$0x1] %v107
    $region25: #{tpu_custom_call.1} parent=1 // pred_fallthru
      _
    // Predicated region
    $region26: #{tpu_custom_call.1} parent=1 // pred_check
      _
    $region27: #{tpu_custom_call.1} parent=1 // pred_check_branch
      %110 = sbr.rel (0) target = $region29
    $region28: #{tpu_custom_call.1} parent=1 // pred_region
      %s112 = ssub.s32 16, 16
      %113 = vsyncadd [#allocation7], %s112
      %s115 = sshll.u32 [#allocation10], 4
      %s116 = int_to_ptr.vmem [resolvable:$true] %s115
      %118 = dma.vmem_to_hbm [thread:$0]  %s116, 16, %s2, [#allocation7]
    $region29: #{tpu_custom_call.1} parent=1 // pred_fallthru
      _
    // Predicated region
    $region30: #{tpu_custom_call.1} parent=1 // pred_check
      _
    $region31: #{tpu_custom_call.1} parent=1 // pred_check_branch
      %120 = sbr.rel (0) target = $region33
    $region32: #{tpu_custom_call.1} parent=1 // pred_region
      %121 = dma.done [#allocation7], 16
    $region33: #{tpu_custom_call.1} parent=1 // pred_fallthru
      _
    %122 = vsyncpa [#allocation6], 1
    %123 = vsyncpa [#allocation9], 1
    %124 = vsyncpa [#allocation7], 1

</llo_original>
